<compile_context>
chip_gen: v7x
topology: tpu7x:2x2x1
jax: 0.10.0
libtpu: 0.0.40
codegen_flags: <defaults>
</compile_context>

<pallas_src>
import functools

import jax
import jax.numpy as jnp
from jax.experimental import pallas as pl
from jax.experimental.pallas import tpu as pltpu


def _upsample_block_kernel(x_ref, w1_ref, b1_ref, w2s_ref, b2_ref, o_ref):
    # x_ref : (1, C_in, tp)     pixels on the lane axis (tp multiple of 128)
    # w1_ref: (hidden, C_in)    b1_ref: (hidden, 1)
    # w2s_ref: (C_out, hidden)  -- already scaled by 1/6 on the host
    # b2_ref: (C_out, 1)
    # o_ref : (1, C_out, tp)
    x = x_ref[0]                                               # (C_in, tp)

    # conv1 (1x1x1) == channel-mixing matmul; bias broadcast along lanes.
    h = jnp.dot(w1_ref[...], x,
                preferred_element_type=jnp.float32) + b1_ref[...]
    # HSwish: h * relu6(h + 3) / 6 ; the 1/6 is folded into W2 (host side).
    a = h * jnp.clip(h + 3.0, 0.0, 6.0)
    # conv2 (1x1x1)
    o = jnp.dot(w2s_ref[...], a,
                preferred_element_type=jnp.float32) + b2_ref[...]
    o_ref[0] = o.astype(o_ref.dtype)


def upsample_block_forward(x_ncthw, w1, b1, w2, b2, *, tile_pixels=32768):
    """Fused UpsampleBlock forward.

    x_ncthw: (N, C_in, T, H, W) float32
    w1: (hidden, C_in)  b1: (hidden,)     -- first 1x1x1 conv
    w2: (C_out, hidden) b2: (C_out,)      -- second 1x1x1 conv
    Returns (N, C_out, T, H, W).
    """
    N, C_in, T, H, W = x_ncthw.shape
    hidden = w1.shape[0]
    C_out = w2.shape[0]
    P = T * H * W

    # Free reshape: NCTHW is already (channels, pixels)-contiguous per batch.
    x3d = x_ncthw.reshape(N, C_in, P)

    # Pad pixels to a multiple of 128 so every block is lane-dense & unmasked.
    P_pad = ((P + 127) // 128) * 128
    if P_pad != P:
        x3d = jnp.pad(x3d, ((0, 0), (0, 0), (0, P_pad - P)))

    # Lane-dense pixel tile, 128-aligned, capped by the (padded) pixel extent.
    tp = max(128, (min(int(tile_pixels), P_pad) // 128) * 128)

    # Keep the grid at >= ~4 steps so both v7x TensorCores are fed and the
    # software pipeline has overlap (harmless at tiny test sizes).
    min_steps = 4
    if N * ((P_pad + tp - 1) // tp) < min_steps and P_pad > 128:
        want_tiles = -(-min_steps // N)                       # ceil
        tp_alt = ((-(-P_pad // want_tiles) + 127) // 128) * 128
        tp = max(128, min(tp, tp_alt))

    grid = (N, (P_pad + tp - 1) // tp)

    # Fold the HSwish 1/6 into the second conv's weight (exact up to rounding).
    w2_scaled = w2.astype(jnp.float32) * (1.0 / 6.0)
    b1_2d = b1.reshape(hidden, 1).astype(jnp.float32)
    b2_2d = b2.reshape(C_out, 1).astype(jnp.float32)

    # VMEM budget: double-buffered in/out blocks + a few (hidden, tp) f32
    # temporaries. Generous 2x margin, clamped to [32 MiB, 64 MiB] so it is
    # safe on v5e (16 MiB scoped default) and v7x (64 MiB physical per TC).
    bytes_per_tp = 4 * (2 * C_in + 2 * C_out + 4 * hidden)
    vmem_budget = int(min(max(2 * bytes_per_tp * tp, 32 << 20), 64 << 20))

    out3d = pl.pallas_call(
        _upsample_block_kernel,
        out_shape=jax.ShapeDtypeStruct((N, C_out, P_pad), x_ncthw.dtype),
        grid_spec=pltpu.PrefetchScalarGridSpec(
            num_scalar_prefetch=0,
            grid=grid,
            in_specs=[
                pl.BlockSpec((1, C_in, tp), lambda n, p: (n, 0, p)),   # x tile
                pl.BlockSpec((hidden, C_in), lambda n, p: (0, 0)),     # W1
                pl.BlockSpec((hidden, 1), lambda n, p: (0, 0)),        # b1
                pl.BlockSpec((C_out, hidden), lambda n, p: (0, 0)),    # W2/6
                pl.BlockSpec((C_out, 1), lambda n, p: (0, 0)),         # b2
            ],
            out_specs=pl.BlockSpec((1, C_out, tp), lambda n, p: (n, 0, p)),
        ),
        compiler_params=pltpu.CompilerParams(
            dimension_semantics=("parallel", "parallel"),
            vmem_limit_bytes=vmem_budget),
    )(x3d, w1.astype(jnp.float32), b1_2d, w2_scaled, b2_2d)

    if P_pad != P:
        out3d = out3d[:, :, :P]
    return out3d.reshape(N, C_out, T, H, W)


def _reference_forward(x_ncthw, w1, b1, w2, b2):
    """Pure-JAX reference with exact PyTorch ordering of ops."""
    N, C_in, T, H, W = x_ncthw.shape
    x3d = x_ncthw.reshape(N, C_in, -1).astype(jnp.float32)
    h = jnp.einsum('hc,ncp->nhp', w1, x3d) + b1[None, :, None]
    h = h * jnp.clip(h + 3.0, 0.0, 6.0) / 6.0
    o = jnp.einsum('oh,nhp->nop', w2, h) + b2[None, :, None]
    return o.reshape(N, w2.shape[0], T, H, W).astype(x_ncthw.dtype)


if __name__ == "__main__":
    # Module config: in_planes=4, factor=3 -> hidden=12, out_planes=8.
    in_planes, factor, out_planes = 4, 3, 8
    hidden_dim = int(factor * in_planes)

    key = jax.random.PRNGKey(0)
    kx1, kx2, kw1, kb1, kw2, kb2 = jax.random.split(key, 6)

    w1 = 0.1 * jax.random.normal(kw1, (hidden_dim, in_planes), dtype=jnp.float32)
    b1 = 0.1 * jax.random.normal(kb1, (hidden_dim,), dtype=jnp.float32)
    # _reset_weights(): last conv weight & bias zeroed (module default).
    w2_zero = jnp.zeros((out_planes, hidden_dim), dtype=jnp.float32)
    b2_zero = jnp.zeros((out_planes,), dtype=jnp.float32)
    # Non-zero variant so conv2 / bias path is numerically exercised too.
    w2_rand = 0.1 * jax.random.normal(kw2, (out_planes, hidden_dim), dtype=jnp.float32)
    b2_rand = 0.1 * jax.random.normal(kb2, (out_planes,), dtype=jnp.float32)

    fwd = functools.partial(upsample_block_forward, tile_pixels=32768)

    # Test A: 128-aligned P (T*H*W = 256), zeroed last conv (module semantics).
    xa = jax.random.normal(kx1, (2, in_planes, 4, 8, 8), dtype=jnp.float32)
    out_a = jax.block_until_ready(fwd(xa, w1, b1, w2_zero, b2_zero))
    ref_a = _reference_forward(xa, w1, b1, w2_zero, b2_zero)
    assert out_a.shape == (2, out_planes, 4, 8, 8), out_a.shape
    assert jnp.allclose(out_a, ref_a, atol=1e-5, rtol=1e-5)

    # Test B: same input, non-zero last conv (exercises W2 fold + bias).
    out_b = jax.block_until_ready(fwd(xa, w1, b1, w2_rand, b2_rand))
    ref_b = _reference_forward(xa, w1, b1, w2_rand, b2_rand)
    assert jnp.allclose(out_b, ref_b, atol=1e-5, rtol=1e-5)

    # Test C: non-128-aligned P (3*7*5 = 105) -> host-side pad path.
    xc = jax.random.normal(kx2, (2, in_planes, 3, 7, 5), dtype=jnp.float32)
    out_c = jax.block_until_ready(fwd(xc, w1, b1, w2_rand, b2_rand))
    ref_c = _reference_forward(xc, w1, b1, w2_rand, b2_rand)
    assert out_c.shape == (2, out_planes, 3, 7, 5), out_c.shape
    assert jnp.allclose(out_c, ref_c, atol=1e-5, rtol=1e-5)

    print("KERNEL_OK")
</pallas_src>

<mosaic_0001>
module attributes {stable_mosaic.version = 11 : i64} {
  func.func @_upsample_block_kernel(%arg0: i32, %arg1: i32, %arg2: memref<1x4x128xf32, #tpu.memory_space<vmem>>, %arg3: memref<12x4xf32, #tpu.memory_space<vmem>>, %arg4: memref<12x1xf32, #tpu.memory_space<vmem>>, %arg5: memref<8x12xf32, #tpu.memory_space<vmem>>, %arg6: memref<8x1xf32, #tpu.memory_space<vmem>>, %arg7: memref<1x8x128xf32, #tpu.memory_space<vmem>>) attributes {dimension_semantics = [#tpu.dimension_semantics<parallel>, #tpu.dimension_semantics<parallel>], iteration_bounds = array<i64: 2, 2>, scalar_prefetch = 0 : i64, scratch_operands = 0 : i64, tpu.core_type = #tpu.core_type<tc>, window_params = [{transform_indices = @transform_0, window_bounds = array<i64: 1, 4, 128>}, {pipeline_mode = #tpu.pipeline_mode<synchronous>, transform_indices = @transform_1, window_bounds = array<i64: 12, 4>}, {pipeline_mode = #tpu.pipeline_mode<synchronous>, transform_indices = @transform_2, window_bounds = array<i64: 12, 1>}, {pipeline_mode = #tpu.pipeline_mode<synchronous>, transform_indices = @transform_3, window_bounds = array<i64: 8, 12>}, {pipeline_mode = #tpu.pipeline_mode<synchronous>, transform_indices = @transform_4, window_bounds = array<i64: 8, 1>}, {transform_indices = @transform_5, window_bounds = array<i64: 1, 8, 128>}]} {
    %c0 = arith.constant 0 : index
    %c0_0 = arith.constant 0 : index
    %c0_1 = arith.constant 0 : index
    %0 = vector.load %arg2[%c0, %c0_0, %c0_1] : memref<1x4x128xf32, #tpu.memory_space<vmem>>, vector<1x4x128xf32>
    %1 = vector.shape_cast %0 : vector<1x4x128xf32> to vector<4x128xf32>
    %c0_2 = arith.constant 0 : index
    %c0_3 = arith.constant 0 : index
    %2 = vector.load %arg3[%c0_2, %c0_3] : memref<12x4xf32, #tpu.memory_space<vmem>>, vector<12x4xf32>
    %cst = arith.constant dense<0.000000e+00> : vector<12x128xf32>
    %3 = tpu.matmul %2, %1, %cst {dimension_numbers = #tpu.dot_dimension_numbers<[1], [0], [0], [1], [0, 0, 1, 1], [], []>} : vector<12x4xf32>, vector<4x128xf32>, vector<12x128xf32> -> vector<12x128xf32>
    %c0_4 = arith.constant 0 : index
    %c0_5 = arith.constant 0 : index
    %4 = vector.load %arg4[%c0_4, %c0_5] : memref<12x1xf32, #tpu.memory_space<vmem>>, vector<12x1xf32>
    %5 = vector.broadcast %4 : vector<12x1xf32> to vector<12x128xf32>
    %6 = arith.addf %3, %5 : vector<12x128xf32>
    %cst_6 = arith.constant 3.000000e+00 : f32
    %7 = vector.broadcast %cst_6 : f32 to vector<12x128xf32>
    %8 = arith.addf %6, %7 : vector<12x128xf32>
    %cst_7 = arith.constant 0.000000e+00 : f32
    %cst_8 = arith.constant 6.000000e+00 : f32
    %9 = vector.broadcast %cst_7 : f32 to vector<12x128xf32>
    %10 = arith.maximumf %9, %8 : vector<12x128xf32>
    %11 = vector.broadcast %cst_8 : f32 to vector<12x128xf32>
    %12 = arith.minimumf %11, %10 : vector<12x128xf32>
    %13 = arith.mulf %6, %12 : vector<12x128xf32>
    %c0_9 = arith.constant 0 : index
    %c0_10 = arith.constant 0 : index
    %14 = vector.load %arg5[%c0_9, %c0_10] : memref<8x12xf32, #tpu.memory_space<vmem>>, vector<8x12xf32>
    %cst_11 = arith.constant dense<0.000000e+00> : vector<8x128xf32>
    %15 = tpu.matmul %14, %13, %cst_11 {dimension_numbers = #tpu.dot_dimension_numbers<[1], [0], [0], [1], [0, 0, 1, 1], [], []>} : vector<8x12xf32>, vector<12x128xf32>, vector<8x128xf32> -> vector<8x128xf32>
    %c0_12 = arith.constant 0 : index
    %c0_13 = arith.constant 0 : index
    %16 = vector.load %arg6[%c0_12, %c0_13] : memref<8x1xf32, #tpu.memory_space<vmem>>, vector<8x1xf32>
    %17 = vector.broadcast %16 : vector<8x1xf32> to vector<8x128xf32>
    %18 = arith.addf %15, %17 : vector<8x128xf32>
    %c0_14 = arith.constant 0 : index
    %c0_15 = arith.constant 0 : index
    %c0_16 = arith.constant 0 : index
    %19 = vector.load %arg7[%c0_14, %c0_15, %c0_16] : memref<1x8x128xf32, #tpu.memory_space<vmem>>, vector<1x8x128xf32>
    %20 = vector.shape_cast %19 : vector<1x8x128xf32> to vector<8x128xf32>
    %21 = vector.shape_cast %18 : vector<8x128xf32> to vector<1x8x128xf32>
    tpu.vector_store %arg7[%c0_14, %c0_15, %c0_16], %21 {strides = array<i32>} : memref<1x8x128xf32, #tpu.memory_space<vmem>>, vector<1x8x128xf32>,
    return
  }
  func.func @transform_0(%arg0: i32, %arg1: i32) -> (i32, i32, i32) {
    %c0_i32 = arith.constant 0 : i32
    %c0_i32_0 = arith.constant 0 : i32
    return %arg0, %c0_i32, %arg1 : i32, i32, i32
  }
  func.func @transform_1(%arg0: i32, %arg1: i32) -> (i32, i32) {
    %c0_i32 = arith.constant 0 : i32
    %c0_i32_0 = arith.constant 0 : i32
    %c0_i32_1 = arith.constant 0 : i32
    return %c0_i32, %c0_i32_0 : i32, i32
  }
  func.func @transform_2(%arg0: i32, %arg1: i32) -> (i32, i32) {
    %c0_i32 = arith.constant 0 : i32
    %c0_i32_0 = arith.constant 0 : i32
    %c0_i32_1 = arith.constant 0 : i32
    return %c0_i32, %c0_i32_0 : i32, i32
  }
  func.func @transform_3(%arg0: i32, %arg1: i32) -> (i32, i32) {
    %c0_i32 = arith.constant 0 : i32
    %c0_i32_0 = arith.constant 0 : i32
    %c0_i32_1 = arith.constant 0 : i32
    return %c0_i32, %c0_i32_0 : i32, i32
  }
  func.func @transform_4(%arg0: i32, %arg1: i32) -> (i32, i32) {
    %c0_i32 = arith.constant 0 : i32
    %c0_i32_0 = arith.constant 0 : i32
    %c0_i32_1 = arith.constant 0 : i32
    return %c0_i32, %c0_i32_0 : i32, i32
  }
  func.func @transform_5(%arg0: i32, %arg1: i32) -> (i32, i32, i32) {
    %c0_i32 = arith.constant 0 : i32
    %c0_i32_0 = arith.constant 0 : i32
    return %arg0, %c0_i32, %arg1 : i32, i32, i32
  }
}

</mosaic_0001>

<llo_original>
// kernel: tpu_custom_call.1
$region0: #{tpu_custom_call.1}
  #allocation0 [shape = 'u32[]', space=smem, size = 0x4, offset = 0x4, fixed_abs, tag = 'smem constant byte address 0x4 - core index']
  #allocation1 [shape = 'u32[144,128]{1,0:T(1,128)}', space=vmem, size = 0x12000, scoped, tag = 'internal scratch']
  %s0 = inlined_call_operand.vmem [shape: f32[2,4,256], index: 0, kind: input, shape index: {}]
  %s1 = inlined_call_operand.vmem [shape: f32[12,4], index: 1, kind: input, shape index: {}]
  %s2 = inlined_call_operand.vmem [shape: f32[12,1], index: 2, kind: input, shape index: {}]
  %s3 = inlined_call_operand.vmem [shape: f32[8,12], index: 3, kind: input, shape index: {}]
  %s4 = inlined_call_operand.vmem [shape: f32[8,1], index: 4, kind: input, shape index: {}]
  %s5 = inlined_call_operand.hbm [shape: f32[2,8,256], index: 5, kind: output, shape index: {}]
  %s6 = sld [smem:[#allocation0]]
  $region53: #{tpu_custom_call.1} parent=0
    _
  %s8 = ssub.s32 1, %s6
  %s9 = scalar_select 0, %s8, %s6
  $region1: #{tpu_custom_call.1} parent=0
    #allocation2 [shape = 'u8[8192]{0}', space=vmem, size = 0x2000, scoped, tag = 'output window, operand 0']
    #allocation3 [shape = 's32[2]{0}', space=sflag, size = 0x8, scoped, tag = 'scoped memory for tpu_custom_call.1']
    %10 = vsyncpa [#allocation3], 0
    %s11 = scalar_lea.sflag [#allocation3], 1
    %12 = vsyncpa %s11, 0
    loop: start=0, step=1, limit=6
    $region2: #{tpu_custom_call.1} parent=1 // loop_pre_header
      _
    $region3: #{tpu_custom_call.1} parent=1 // loop_header
      %s14 = sphi 0, %s18
      %p15 = scmp.ge.s32.totalorder %s14, 6
      %s21 = sphi 0, %s33
      %s22 = sphi 0, %s29
      %s23 = sphi 0, %s21
      %s24 = sphi 0, %s22
      %s25 = sphi 0, %s23
      %s26 = sphi 0, %s24
      %s38 = sphi 0, %s40
      %s41 = sphi 0, %s38
      %s42 = sphi 0, %s41
      %s58 = sphi 0, %s42
      %s62 = sphi 0, %s62
      %s64 = sphi 0, %s62
      %s65 = sphi 0, %s64
      %s79 = sphi 0, %s65
      %s83 = sphi 0, %s83
      %s85 = sphi 0, %s83
      %s86 = sphi 0, %s85
      %s100 = sphi 0, %s86
      %s104 = sphi 0, %s104
      %s106 = sphi 0, %s104
      %s107 = sphi 0, %s106
      %s121 = sphi 0, %s107
      %s125 = sphi 0, %s125
      %s127 = sphi 0, %s125
      %s128 = sphi 0, %s127
      %s142 = sphi 0, %s128
      %s150 = sphi 0, %s152
      %s153 = sphi 0, %s150
      %s154 = sphi 0, %s153
      %s170 = sphi 0, %s154
    $region4: #{tpu_custom_call.1} parent=1 // loop_header_branch
      %17 = sbr.rel (%p15) target = $region8
    $region5: #{tpu_custom_call.1} parent=1 // loop_body
      %s19 = ssub.s32 %s14, 1
      %s20 = ssub.s32 %s14, 2
      %s27 = sadd.s32 1, %s22
      %p28 = scmp.ge.s32.totalorder %s27, 2
      %s29 = scalar_select %p28, 0, %s27
      %s30 = sadd.s32 1, %s21
      %s31 = scalar_select %p28, %s30, %s21
      %p32 = scmp.ge.s32.totalorder %s31, 2
      %s33 = scalar_select %p32, 0, %s31
      %s34 = ssub.s32 %s21, %s33
      %s35 = ssub.s32 %s22, %s29
      %s36 = sor.u32 %s34, %s35
      %p37 = scmp.eq.s32.totalorder %s36, 0
      %s39 = sadd.s32 %s38, 1
      %s40 = scalar_select %p37, %s38, %s39
      %p43 = pneg %p37
      %p44 = scmp.eq.s32.totalorder %s14, 3
      %p45 = por %p43, %p44
      %p46 = scmp.ne.s32.totalorder %s38, %s41
      %p47 = scmp.eq.s32.totalorder %s14, 0
      %p48 = por %p46, %p47
      %p49 = scmp.ne.s32.totalorder %s38, %s41
      %p50 = scmp.eq.s32.totalorder %s19, 3
      %p51 = por %p49, %p50
      %p52 = scmp.ne.s32.totalorder %s41, %s42
      %p53 = scmp.eq.s32.totalorder %s19, 0
      %p54 = por %p52, %p53
      %p55 = scmp.ne.s32.totalorder %s41, %s42
      %p56 = scmp.eq.s32.totalorder %s20, 3
      %p57 = por %p55, %p56
      %p59 = scmp.ne.s32.totalorder %s42, %s58
      %p60 = scmp.eq.s32.totalorder %s20, 0
      %p61 = por %p59, %p60
      %s63 = sadd.s32 %s62, 1
      %p66 = scmp.eq.s32.totalorder %s14, 3
      %p67 = scmp.ne.s32.totalorder %s62, %s64
      %p68 = scmp.eq.s32.totalorder %s14, 0
      %p69 = por %p67, %p68
      %p70 = scmp.ne.s32.totalorder %s62, %s64
      %p71 = scmp.eq.s32.totalorder %s19, 3
      %p72 = por %p70, %p71
      %p73 = scmp.ne.s32.totalorder %s64, %s65
      %p74 = scmp.eq.s32.totalorder %s19, 0
      %p75 = por %p73, %p74
      %p76 = scmp.ne.s32.totalorder %s64, %s65
      %p77 = scmp.eq.s32.totalorder %s20, 3
      %p78 = por %p76, %p77
      %p80 = scmp.ne.s32.totalorder %s65, %s79
      %p81 = scmp.eq.s32.totalorder %s20, 0
      %p82 = por %p80, %p81
      %s84 = sadd.s32 %s83, 1
      %p87 = scmp.eq.s32.totalorder %s14, 3
      %p88 = scmp.ne.s32.totalorder %s83, %s85
      %p89 = scmp.eq.s32.totalorder %s14, 0
      %p90 = por %p88, %p89
      %p91 = scmp.ne.s32.totalorder %s83, %s85
      %p92 = scmp.eq.s32.totalorder %s19, 3
      %p93 = por %p91, %p92
      %p94 = scmp.ne.s32.totalorder %s85, %s86
      %p95 = scmp.eq.s32.totalorder %s19, 0
      %p96 = por %p94, %p95
      %p97 = scmp.ne.s32.totalorder %s85, %s86
      %p98 = scmp.eq.s32.totalorder %s20, 3
      %p99 = por %p97, %p98
      %p101 = scmp.ne.s32.totalorder %s86, %s100
      %p102 = scmp.eq.s32.totalorder %s20, 0
      %p103 = por %p101, %p102
      %s105 = sadd.s32 %s104, 1
      %p108 = scmp.eq.s32.totalorder %s14, 3
      %p109 = scmp.ne.s32.totalorder %s104, %s106
      %p110 = scmp.eq.s32.totalorder %s14, 0
      %p111 = por %p109, %p110
      %p112 = scmp.ne.s32.totalorder %s104, %s106
      %p113 = scmp.eq.s32.totalorder %s19, 3
      %p114 = por %p112, %p113
      %p115 = scmp.ne.s32.totalorder %s106, %s107
      %p116 = scmp.eq.s32.totalorder %s19, 0
      %p117 = por %p115, %p116
      %p118 = scmp.ne.s32.totalorder %s106, %s107
      %p119 = scmp.eq.s32.totalorder %s20, 3
      %p120 = por %p118, %p119
      %p122 = scmp.ne.s32.totalorder %s107, %s121
      %p123 = scmp.eq.s32.totalorder %s20, 0
      %p124 = por %p122, %p123
      %s126 = sadd.s32 %s125, 1
      %p129 = scmp.eq.s32.totalorder %s14, 3
      %p130 = scmp.ne.s32.totalorder %s125, %s127
      %p131 = scmp.eq.s32.totalorder %s14, 0
      %p132 = por %p130, %p131
      %p133 = scmp.ne.s32.totalorder %s125, %s127
      %p134 = scmp.eq.s32.totalorder %s19, 3
      %p135 = por %p133, %p134
      %p136 = scmp.ne.s32.totalorder %s127, %s128
      %p137 = scmp.eq.s32.totalorder %s19, 0
      %p138 = por %p136, %p137
      %p139 = scmp.ne.s32.totalorder %s127, %s128
      %p140 = scmp.eq.s32.totalorder %s20, 3
      %p141 = por %p139, %p140
      %p143 = scmp.ne.s32.totalorder %s128, %s142
      %p144 = scmp.eq.s32.totalorder %s20, 0
      %p145 = por %p143, %p144
      %s146 = ssub.s32 %s21, %s33
      %s147 = ssub.s32 %s22, %s29
      %s148 = sor.u32 %s146, %s147
      %p149 = scmp.eq.s32.totalorder %s148, 0
      %s151 = sadd.s32 %s150, 1
      %s152 = scalar_select %p149, %s150, %s151
      %p155 = pneg %p149
      %p156 = scmp.eq.s32.totalorder %s14, 3
      %p157 = por %p155, %p156
      %p158 = scmp.ne.s32.totalorder %s150, %s153
      %p159 = scmp.eq.s32.totalorder %s14, 0
      %p160 = por %p158, %p159
      %p161 = scmp.ne.s32.totalorder %s150, %s153
      %p162 = scmp.eq.s32.totalorder %s19, 3
      %p163 = por %p161, %p162
      %p164 = scmp.ne.s32.totalorder %s153, %s154
      %p165 = scmp.eq.s32.totalorder %s19, 0
      %p166 = por %p164, %p165
      %p167 = scmp.ne.s32.totalorder %s153, %s154
      %p168 = scmp.eq.s32.totalorder %s20, 3
      %p169 = por %p167, %p168
      %p171 = scmp.ne.s32.totalorder %s154, %s170
      %p172 = scmp.eq.s32.totalorder %s20, 0
      %p173 = por %p171, %p172
      %p174 = scmp.le.s32.totalorder 1, %s14
      %p175 = scmp.lt.s32.totalorder %s14, 5
      %p176 = pnand %p174, %p175
      %p177 = pneg %p176
      // Predicated region
      $region9: #{tpu_custom_call.1} parent=5 // pred_check
        _
      $region10: #{tpu_custom_call.1} parent=5 // pred_check_branch
        %179 = sbr.rel (%p176) target = $region12
      $region11: #{tpu_custom_call.1} parent=5 // pred_region
        %s180 = ssub.s32 %s14, 1
        // Predicated region
        $region13: #{tpu_custom_call.1} parent=11 // pred_check
          %p181 = pneg %p75
        $region14: #{tpu_custom_call.1} parent=11 // pred_check_branch
          %183 = sbr.rel (%p181) target = $region16
        $region15: #{tpu_custom_call.1} parent=11 // pred_region
          _
        $region16: #{tpu_custom_call.1} parent=11 // pred_fallthru
          _
        // Predicated region
        $region17: #{tpu_custom_call.1} parent=11 // pred_check
          %p184 = pneg %p96
        $region18: #{tpu_custom_call.1} parent=11 // pred_check_branch
          %186 = sbr.rel (%p184) target = $region20
        $region19: #{tpu_custom_call.1} parent=11 // pred_region
          _
        $region20: #{tpu_custom_call.1} parent=11 // pred_fallthru
          _
        // Predicated region
        $region21: #{tpu_custom_call.1} parent=11 // pred_check
          %p187 = pneg %p117
        $region22: #{tpu_custom_call.1} parent=11 // pred_check_branch
          %189 = sbr.rel (%p187) target = $region24
        $region23: #{tpu_custom_call.1} parent=11 // pred_region
          _
        $region24: #{tpu_custom_call.1} parent=11 // pred_fallthru
          _
        // Predicated region
        $region25: #{tpu_custom_call.1} parent=11 // pred_check
          %p190 = pneg %p138
        $region26: #{tpu_custom_call.1} parent=11 // pred_check_branch
          %192 = sbr.rel (%p190) target = $region28
        $region27: #{tpu_custom_call.1} parent=11 // pred_region
          _
        $region28: #{tpu_custom_call.1} parent=11 // pred_fallthru
          _
      $region12: #{tpu_custom_call.1} parent=5 // pred_fallthru
        _
      %p193 = scmp.lt.s32.totalorder %s14, 4
      // Predicated region
      $region29: #{tpu_custom_call.1} parent=5 // pred_check
        %p194 = pneg %p193
      $region30: #{tpu_custom_call.1} parent=5 // pred_check_branch
        %196 = sbr.rel (%p194) target = $region32
      $region31: #{tpu_custom_call.1} parent=5 // pred_region
        // Predicated region
        $region33: #{tpu_custom_call.1} parent=31 // pred_check
          %p197 = pneg %p48
        $region34: #{tpu_custom_call.1} parent=31 // pred_check_branch
          %199 = sbr.rel (%p197) target = $region36
        $region35: #{tpu_custom_call.1} parent=31 // pred_region
          %p200 = scmp.lt.s32.totalorder %s21, 1
          %s201 = scalar_select %p200, %s21, 1
          %p202 = scmp.lt.s32.totalorder %s22, 1
          %s203 = scalar_select %p202, %s22, 1
          %s204 = smul.addr %s201, 2
          %s205 = sadd.s32 %s203, %s204
          %s206 = smul.addr %s205, 4
          %s207 = scalar_lea.vmem %s0, %s206
        $region36: #{tpu_custom_call.1} parent=31 // pred_fallthru
          _
      $region32: #{tpu_custom_call.1} parent=5 // pred_fallthru
        _
      %p208 = scmp.le.s32.totalorder 1, %s14
      %p209 = scmp.lt.s32.totalorder %s14, 5
      %p210 = pnand %p208, %p209
      %p211 = pneg %p210
      // Predicated region
      $region37: #{tpu_custom_call.1} parent=5 // pred_check
        _
      $region38: #{tpu_custom_call.1} parent=5 // pred_check_branch
        %213 = sbr.rel (%p210) target = $region40
      $region39: #{tpu_custom_call.1} parent=5 // pred_region
        %s214 = ssub.s32 %s14, 1
        %p215 = scmp.lt.s32.totalorder %s23, 1
        %s216 = scalar_select %p215, %s23, 1
        %p217 = scmp.lt.s32.totalorder %s24, 1
        %s218 = scalar_select %p217, %s24, 1
        %s219 = smul.addr %s216, 2
        %s220 = sadd.s32 %s218, %s219
        %s221 = smul.addr %s220, 4
        %s222 = scalar_lea.vmem %s0, %s221
        %p223 = pneg %p54
        %p224 = pneg %p51
        %p225 = pneg %p75
        %p226 = pneg %p72
        %p227 = pneg %p96
        %p228 = pneg %p93
        %p229 = pneg %p117
        %p230 = pneg %p114
        %p231 = pneg %p138
        %p232 = pneg %p135
        %p233 = pneg %p166
        %p234 = pneg %p163
        %s235 = sand.u32 %s153, 1
        %s236 = scalar_lea.sflag [#allocation3], %s235
        %s237 = sand.u32 %s153, 1
        %s238 = smul.addr %s237, 8
        %s239 = scalar_lea.vmem [#allocation2], %s238
        %p240 = scmp.lt.s32.totalorder %s23, 1
        %s241 = scalar_select %p240, %s23, 1
        %p242 = scmp.lt.s32.totalorder %s24, 1
        %s243 = scalar_select %p242, %s24, 1
        %s244 = smul.addr %s241, 2
        %s245 = sadd.s32 %s243, %s244
        %s246 = smul.addr %s245, 4
        %s247 = scalar_lea.vmem %s0, %s246
        %v248 = vld [vmem:[%s247] sm:$0xf]
        %v249 = vld [vmem:[%s1] sm:$0xff]
        %v250 = vld [vmem:[%s1 + $0x8] sm:$0xf]
        %v251 = vld [vmem:[%s2] sm:$0xff]
        %v252 = vld [vmem:[%s2 + $0x8] sm:$0xf]
        %254 = vset.pattern.permute.xlu0 0
        %255 = vperm.xlu0 %254, %v251
        %v256 = vpop.permute.xlu0 %255
        %259 = vset.pattern.permute.xlu0 0
        %260 = vperm.xlu0 %259, %v252
        %v261 = vpop.permute.xlu0 %260
        %vm263 = vcmask 31744
        %v265 = vsel %vm263, %v249, 0
        %v268 = vsel %vm263, %v250, 0
        %vm270 = vcmask 1043456
        %v272 = vsel %vm270, %v248, 0
        %274 = vmatprep.subr.mxu0 0.0
        %275 = vmatpush1.msra.mxu0 %v272
        %276 = vmatprep.subr.mxu0 0.0
        %277 = vmatpush1.msra.mxu0 0.0
        %278 = vmatprep.subr.mxu0 0.0
        %279 = vmatpush1.msra.mxu0 0.0
        %280 = vmatprep.subr.mxu0 0.0
        %281 = vmatpush1.msra.mxu0 0.0
        %282 = vmatprep.subr.mxu0 0.0
        %283 = vmatpush1.msra.mxu0 0.0
        %284 = vmatprep.subr.mxu0 0.0
        %285 = vmatpush1.msra.mxu0 0.0
        %286 = vmatprep.subr.mxu0 0.0
        %287 = vmatpush1.msra.mxu0 0.0
        %288 = vmatprep.subr.mxu0 0.0
        %289 = vmatpush1.msra.mxu0 0.0
        %290 = vmatprep.subr.mxu0 0.0
        %291 = vmatpush1.msra.mxu0 0.0
        %292 = vmatprep.subr.mxu0 0.0
        %293 = vmatpush1.msra.mxu0 0.0
        %294 = vmatprep.subr.mxu0 0.0
        %295 = vmatpush1.msra.mxu0 0.0
        %296 = vmatprep.subr.mxu0 0.0
        %297 = vmatpush1.msra.mxu0 0.0
        %298 = vmatprep.subr.mxu0 0.0
        %299 = vmatpush1.msra.mxu0 0.0
        %300 = vmatprep.subr.mxu0 0.0
        %301 = vmatpush1.msra.mxu0 0.0
        %302 = vmatprep.subr.mxu0 0.0
        %303 = vmatpush1.msra.mxu0 0.0
        %304 = vmatprep.subr.mxu0 0.0
        %305 = vmatpush1.msra.mxu0 0.0
        %306 = vmatprep.subr.mxu0 0.0
        %307 = vmatpush1.msra.mxu0 0.0
        %308 = vmatprep.subr.mxu0 0.0
        %309 = vmatpush1.msra.mxu0 0.0
        %310 = vmatprep.subr.mxu0 0.0
        %311 = vmatpush1.msra.mxu0 0.0
        %312 = vmatprep.subr.mxu0 0.0
        %313 = vmatpush1.msra.mxu0 0.0
        %314 = vmatprep.subr.mxu0 0.0
        %315 = vmatpush1.msra.mxu0 0.0
        %316 = vmatprep.subr.mxu0 0.0
        %317 = vmatpush1.msra.mxu0 0.0
        %318 = vmatprep.subr.mxu0 0.0
        %319 = vmatpush1.msra.mxu0 0.0
        %320 = vmatprep.subr.mxu0 0.0
        %321 = vmatpush1.msra.mxu0 0.0
        %322 = vmatprep.subr.mxu0 0.0
        %323 = vmatpush1.msra.mxu0 0.0
        %324 = vmatprep.subr.mxu0 0.0
        %325 = vmatpush1.msra.mxu0 0.0
        %326 = vmatprep.subr.mxu0 0.0
        %327 = vmatpush1.msra.mxu0 0.0
        %328 = vmatprep.subr.mxu0 0.0
        %329 = vmatpush1.msra.mxu0 0.0
        %330 = vmatprep.subr.mxu0 0.0
        %331 = vmatpush1.msra.mxu0 0.0
        %332 = vmatprep.subr.mxu0 0.0
        %333 = vmatpush1.msra.mxu0 0.0
        %334 = vmatprep.subr.mxu0 0.0
        %335 = vmatpush1.msra.mxu0 0.0
        %336 = vmatprep.subr.mxu0 0.0
        %337 = vmatpush1.msra.mxu0 0.0
        %338 = vmatprep.mubr.f32.mxu0 0.0
        %339 = vmatmul.mubr.f32.gmra.mrb[0].mxu0 %v265
        %v340 = vpop.f32.mrb[0].mxu0
        %v341 = vadd.f32 %v256, %v340
        %v342 = vpop.f32.mrb[0].mxu0
        %343 = vmatprep.mubr.f32.mxu0 0.0
        %344 = vmatmul.mubr.f32.gmra.mrb[0].mxu0 %v268
        %v345 = vpop.f32.mrb[0].mxu0
        %v346 = vadd.f32 %v261, %v345
        %v347 = vpop.f32.mrb[0].mxu0
        %348 = vdwg.mxu0
        %v349 = vadd.f32 %v341, 3.0
        %v350 = vadd.f32 %v346, 3.0
        %v351 = vmax.f32 %v349, 0.0
        %v352 = vmax.f32 %v350, 0.0
        %v353 = vmin.f32 %v351, 6.0
        %v354 = vmin.f32 %v352, 6.0
        %v355 = vmul.f32 %v341, %v353
        %v356 = vmul.f32 %v346, %v354
        %v357 = vld [vmem:[%s3] sm:$0xff]
        %v358 = vld [vmem:[%s4] sm:$0xff]
        %360 = vset.pattern.permute.xlu0 0
        %361 = vperm.xlu0 %360, %v358
        %v362 = vpop.permute.xlu0 %361
        %vm364 = vcmask 97280
        %v366 = vsel %vm364, %v357, 0
        %v369 = vsel %vm270, %v356, 0
        %371 = vmatprep.subr.mxu0 0.0
        %372 = vmatpush1.msra.mxu0 %v355
        %373 = vmatprep.subr.mxu0 0.0
        %374 = vmatpush1.msra.mxu0 %v369
        %375 = vmatprep.subr.mxu0 0.0
        %376 = vmatpush1.msra.mxu0 0.0
        %377 = vmatprep.subr.mxu0 0.0
        %378 = vmatpush1.msra.mxu0 0.0
        %379 = vmatprep.subr.mxu0 0.0
        %380 = vmatpush1.msra.mxu0 0.0
        %381 = vmatprep.subr.mxu0 0.0
        %382 = vmatpush1.msra.mxu0 0.0
        %383 = vmatprep.subr.mxu0 0.0
        %384 = vmatpush1.msra.mxu0 0.0
        %385 = vmatprep.subr.mxu0 0.0
        %386 = vmatpush1.msra.mxu0 0.0
        %387 = vmatprep.subr.mxu0 0.0
        %388 = vmatpush1.msra.mxu0 0.0
        %389 = vmatprep.subr.mxu0 0.0
        %390 = vmatpush1.msra.mxu0 0.0
        %391 = vmatprep.subr.mxu0 0.0
        %392 = vmatpush1.msra.mxu0 0.0
        %393 = vmatprep.subr.mxu0 0.0
        %394 = vmatpush1.msra.mxu0 0.0
        %395 = vmatprep.subr.mxu0 0.0
        %396 = vmatpush1.msra.mxu0 0.0
        %397 = vmatprep.subr.mxu0 0.0
        %398 = vmatpush1.msra.mxu0 0.0
        %399 = vmatprep.subr.mxu0 0.0
        %400 = vmatpush1.msra.mxu0 0.0
        %401 = vmatprep.subr.mxu0 0.0
        %402 = vmatpush1.msra.mxu0 0.0
        %403 = vmatprep.subr.mxu0 0.0
        %404 = vmatpush1.msra.mxu0 0.0
        %405 = vmatprep.subr.mxu0 0.0
        %406 = vmatpush1.msra.mxu0 0.0
        %407 = vmatprep.subr.mxu0 0.0
        %408 = vmatpush1.msra.mxu0 0.0
        %409 = vmatprep.subr.mxu0 0.0
        %410 = vmatpush1.msra.mxu0 0.0
        %411 = vmatprep.subr.mxu0 0.0
        %412 = vmatpush1.msra.mxu0 0.0
        %413 = vmatprep.subr.mxu0 0.0
        %414 = vmatpush1.msra.mxu0 0.0
        %415 = vmatprep.subr.mxu0 0.0
        %416 = vmatpush1.msra.mxu0 0.0
        %417 = vmatprep.subr.mxu0 0.0
        %418 = vmatpush1.msra.mxu0 0.0
        %419 = vmatprep.subr.mxu0 0.0
        %420 = vmatpush1.msra.mxu0 0.0
        %421 = vmatprep.subr.mxu0 0.0
        %422 = vmatpush1.msra.mxu0 0.0
        %423 = vmatprep.subr.mxu0 0.0
        %424 = vmatpush1.msra.mxu0 0.0
        %425 = vmatprep.subr.mxu0 0.0
        %426 = vmatpush1.msra.mxu0 0.0
        %427 = vmatprep.subr.mxu0 0.0
        %428 = vmatpush1.msra.mxu0 0.0
        %429 = vmatprep.subr.mxu0 0.0
        %430 = vmatpush1.msra.mxu0 0.0
        %431 = vmatprep.subr.mxu0 0.0
        %432 = vmatpush1.msra.mxu0 0.0
        %433 = vmatprep.subr.mxu0 0.0
        %434 = vmatpush1.msra.mxu0 0.0
        %435 = vmatprep.mubr.f32.mxu0 0.0
        %436 = vmatmul.mubr.f32.gmra.mrb[0].mxu0 %v366
        %v437 = vpop.f32.mrb[0].mxu0
        %v438 = vadd.f32 %v362, %v437
        %v439 = vpop.f32.mrb[0].mxu0
        %440 = vdwg.mxu0
        %441 = vst [vmem:[%s239] sm:$0xff] %v438
        %s442 = sand.u32 %s153, 1
        %s443 = scalar_lea.sflag [#allocation3], %s442
        %s444 = sand.u32 %s153, 1
        %s445 = smul.addr %s444, 8
        %s446 = scalar_lea.vmem [#allocation2], %s445
        // Predicated region
        $region41: #{tpu_custom_call.1} parent=39 // pred_check
          %p447 = pneg %p163
        $region42: #{tpu_custom_call.1} parent=39 // pred_check_branch
          %449 = sbr.rel (%p447) target = $region44
        $region43: #{tpu_custom_call.1} parent=39 // pred_region
          %s451 = ssub.s32 128, 128
          %452 = vsyncadd %s443, %s451
          %s453 = smul.addr %s23, 2
          %s454 = sadd.s32 %s24, %s453
          %s455 = smul.addr %s454, 128
          %s456 = scalar_lea.hbm %s5, %s455
          %s458 = sshll.u32 %s446, 4
          %s459 = int_to_ptr.vmem [resolvable:$true] %s458
          %461 = dma.vmem_to_hbm [thread:$0]  %s459, 128, %s456, %s443
        $region44: #{tpu_custom_call.1} parent=39 // pred_fallthru
          _
      $region40: #{tpu_custom_call.1} parent=5 // pred_fallthru
        _
      %p462 = scmp.le.s32.totalorder 2, %s14
      // Predicated region
      $region45: #{tpu_custom_call.1} parent=5 // pred_check
        %p463 = pneg %p462
      $region46: #{tpu_custom_call.1} parent=5 // pred_check_branch
        %465 = sbr.rel (%p463) target = $region48
      $region47: #{tpu_custom_call.1} parent=5 // pred_region
        %s466 = ssub.s32 %s14, 2
        // Predicated region
        $region49: #{tpu_custom_call.1} parent=47 // pred_check
          %p467 = pneg %p169
        $region50: #{tpu_custom_call.1} parent=47 // pred_check_branch
          %469 = sbr.rel (%p467) target = $region52
        $region51: #{tpu_custom_call.1} parent=47 // pred_region
          %s470 = sand.u32 %s154, 1
          %s471 = scalar_lea.sflag [#allocation3], %s470
          %s472 = sand.u32 %s154, 1
          %s473 = smul.addr %s472, 8
          %s474 = scalar_lea.vmem [#allocation2], %s473
          %475 = dma.done %s471, 128
        $region52: #{tpu_custom_call.1} parent=47 // pred_fallthru
          _
      $region48: #{tpu_custom_call.1} parent=5 // pred_fallthru
        _
    $region6: #{tpu_custom_call.1} parent=1 // loop_footer
      %s18 = sadd.s32 1, %s14
    $region7: #{tpu_custom_call.1} parent=1 // loop_footer_branch
      %13 = sbr.rel target = $region3
    $region8: #{tpu_custom_call.1} parent=1 // loop_exit
      _
    %476 = vsyncpa [#allocation3], 1
    %s477 = scalar_lea.sflag [#allocation3], 1
    %478 = vsyncpa %s477, 1

</llo_original>
